<compile_context>
chip_gen: v7x
topology: tpu7x:2x2x1
jax: 0.10.0
libtpu: 0.0.40
codegen_flags: <defaults>
</compile_context>

<pallas_src>
import functools

import jax
import jax.numpy as jnp
from jax import lax
from jax.experimental import pallas as pl
from jax.experimental.pallas import tpu as pltpu


# ----------------------------- Pallas kernels ------------------------------

def _linear_kernel(x_ref, w_ref, b_ref, o_ref, acc_ref):
    # Tiled y = x @ w + b with f32 accumulation over the K grid axis.
    @pl.when(pl.program_id(2) == 0)
    def _init():
        acc_ref[...] = jnp.zeros_like(acc_ref)

    # In-kernel bf16 cast (no-op when the input is already bf16): avoids a
    # separate XLA cast pass (extra full HBM read+write) in the wrapper.
    acc_ref[...] += jnp.dot(x_ref[...].astype(jnp.bfloat16),
                            w_ref[...].astype(jnp.bfloat16),
                            preferred_element_type=jnp.float32)

    @pl.when(pl.program_id(2) == pl.num_programs(2) - 1)
    def _finalize():
        o_ref[...] = (acc_ref[...] + b_ref[...]).astype(o_ref.dtype)


def _pick_tile(dim, target, align):
    """Largest multiple of `align` that divides `dim` and is <= target.

    Falls back to the full dimension (always a legal Pallas block) only when no
    aligned divisor exists (small / oddly-shaped dims).
    """
    if dim <= target:
        return dim
    start = (min(target, dim) // align) * align
    for cand in range(start, 0, -align):
        if dim % cand == 0:
            return cand
    # TODO(synk): masked tail tiles (pl.cdiv grid) for huge dims not divisible
    # by `align`; for this model's shapes the full-dim fallback is tiny.
    return dim


def pallas_linear(x, w, b, out_dtype=jnp.float32, tm=512, tn=512, tk=1024):
    """y = x @ w + b.  x:(M,K), w:(K,N) (bf16), b:(N,).  f32 accumulation."""
    M, K = x.shape
    K2, N = w.shape
    assert K == K2
    tm = _pick_tile(M, tm, 8)      # sublane dim of x / out
    tn = _pick_tile(N, tn, 128)    # lane dim of w / out
    tk = _pick_tile(K, tk, 128)    # lane dim of x, sublane dim of w
    b2 = b.reshape(1, N).astype(jnp.float32)
    return pl.pallas_call(
        _linear_kernel,
        out_shape=jax.ShapeDtypeStruct((M, N), out_dtype),
        grid=(M // tm, N // tn, K // tk),
        in_specs=[
            pl.BlockSpec((tm, tk), lambda i, j, kk: (i, kk)),
            pl.BlockSpec((tk, tn), lambda i, j, kk: (kk, j)),
            pl.BlockSpec((1, tn), lambda i, j, kk: (0, j)),
        ],
        out_specs=pl.BlockSpec((tm, tn), lambda i, j, kk: (i, j)),
        scratch_shapes=[pltpu.VMEM((tm, tn), jnp.float32)],
        compiler_params=pltpu.CompilerParams(
            dimension_semantics=("parallel", "parallel", "arbitrary")),
    )(x, w, b2)


def _attn_kernel(qkv_ref, cos_ref, sl_ref, sr_ref, o_ref, *w_refs,
                 n_heads, d_k, d_v, need_weights):
    # One batch element per grid step; all heads processed head-packed [L, H*d].
    Hdk = n_heads * d_k
    qkv = qkv_ref[0]                               # (L, 2*Hdk+Hdv) bf16
    q = qkv[:, :Hdk].astype(jnp.float32)
    k = qkv[:, Hdk:2 * Hdk].astype(jnp.float32)
    v = qkv[:, 2 * Hdk:]                           # stays bf16 (MXU operand)
    cos = cos_ref[...]
    sl = sl_ref[...]                               # -sin on odd lanes, 0 on even
    sr = sr_ref[...]                               # +sin on even lanes, 0 on odd

    def rope(x):
        # Interleaved RoPE: x*cos + pair_swap(x)*sin, pair_swap realized as two
        # XLU lane rotations with sign/parity folded into the sin tables
        # (head boundaries / wrap-around are zeroed by the parity masking).
        # Kept in f32: v5e has no bf16 VPU/EUP.
        return (x * cos
                + pltpu.roll(x * sl, shift=Hdk - 1, axis=1)   # roll by -1
                + pltpu.roll(x * sr, shift=1, axis=1))        # roll by +1

    qr = rope(q).astype(jnp.bfloat16)              # 1/sqrt(d_k) folded into W_Q
    kr = rope(k).astype(jnp.bfloat16)

    outs = []
    # TODO(synk): for n_heads >= 8 move heads onto the grid (or fori_loop over a
    # head-tiled scratch) so the per-head (L, L) intermediates don't all stay live.
    for h in range(n_heads):                       # static unroll (n_heads = 4)
        qh = qr[:, h * d_k:(h + 1) * d_k]
        kh = kr[:, h * d_k:(h + 1) * d_k]
        vh = v[:, h * d_v:(h + 1) * d_v]
        # scores = qh @ kh^T without materializing the transpose.
        s = lax.dot_general(qh, kh, (((1,), (1,)), ((), ())),
                            preferred_element_type=jnp.float32)      # (L, L)
        m = jnp.max(s, axis=-1, keepdims=True)
        e = jnp.exp(s - m)
        # Exact divide: these weights are returned, keep rows summing to 1.
        p = e / jnp.sum(e, axis=-1, keepdims=True)
        if need_weights:
            # Full (L, L) slab addressed on a leading axis -> not a lane-narrow
            # masked store (unlike the old per-head d_v-wide output stores).
            w_refs[0][0, h] = p
        outs.append(jnp.dot(p.astype(jnp.bfloat16), vh,
                            preferred_element_type=jnp.float32))

    # Single lane-dense store of all heads at once (review item #1): the
    # concatenation happens in vregs, then one (L, H*d_v)-wide store.
    o_ref[0] = jnp.concatenate(outs, axis=-1).astype(o_ref.dtype)


def pallas_attention(qkv, cos_t, sl_t, sr_t, n_heads, d_k, d_v,
                     need_weights=True):
    """qkv: (bs, L, 2*H*d_k + H*d_v) bf16; tables: (L, H*d_k) f32."""
    bs, L, C = qkv.shape
    Hdk, Hdv = n_heads * d_k, n_heads * d_v
    assert C == 2 * Hdk + Hdv

    o_shape = jax.ShapeDtypeStruct((bs, L, Hdv), jnp.bfloat16)
    o_spec = pl.BlockSpec((1, L, Hdv), lambda b: (b, 0, 0))
    if need_weights:
        out_shape = (o_shape,
                     jax.ShapeDtypeStruct((bs, n_heads, L, L), jnp.float32))
        out_specs = (o_spec,
                     pl.BlockSpec((1, n_heads, L, L), lambda b: (b, 0, 0, 0)))
    else:
        out_shape, out_specs = o_shape, o_spec

    # Explicit VMEM budget: double-buffered blocks + headroom, capped at v7x's
    # 64 MiB physical VMEM (flash/head-tiled grid needed beyond that — see TODO).
    per_step = (L * C * 2 + 3 * L * Hdk * 4 + L * Hdv * 2
                + (n_heads * L * L * 4 if need_weights else 0))
    vmem_limit = int(min(64 << 20, max(32 << 20, 2 * per_step + (2 << 20))))

    kernel = functools.partial(_attn_kernel, n_heads=n_heads, d_k=d_k,
                               d_v=d_v, need_weights=need_weights)
    res = pl.pallas_call(
        kernel,
        out_shape=out_shape,
        grid=(bs,),
        in_specs=[
            pl.BlockSpec((1, L, C), lambda b: (b, 0, 0)),
            pl.BlockSpec((L, Hdk), lambda b: (0, 0)),
            pl.BlockSpec((L, Hdk), lambda b: (0, 0)),
            pl.BlockSpec((L, Hdk), lambda b: (0, 0)),
        ],
        out_specs=out_specs,
        compiler_params=pltpu.CompilerParams(
            dimension_semantics=("parallel",),
            vmem_limit_bytes=vmem_limit),
    )(qkv, cos_t, sl_t, sr_t)
    if need_weights:
        return res[0], res[1]
    return res, None


# ------------------------------- JAX glue ----------------------------------

def rope_cos_sin(max_len, output_dim):
    """Interleaved-RoPE cos/sin tables (factor=1), width `output_dim`."""
    pos = jnp.arange(max_len, dtype=jnp.float32)[:, None]            # (L, 1)
    ids = jnp.arange(output_dim // 2, dtype=jnp.float32)             # (D/2,)
    theta = jnp.power(10000.0, -2.0 * ids / output_dim)              # (D/2,)
    ang = pos * theta                                                # (L, D/2)
    cos_pos = jnp.repeat(jnp.cos(ang), 2, axis=-1)                   # (L, D)
    sin_pos = jnp.repeat(jnp.sin(ang), 2, axis=-1)                   # (L, D)
    return cos_pos, sin_pos


def rope_tables_packed(max_len, d_k, n_heads):
    """cos + two sign/parity-masked sin tables, tiled to the head-packed width."""
    cos_pos, sin_pos = rope_cos_sin(max_len, d_k)
    odd = (jnp.arange(d_k) % 2) == 1
    sin_left = jnp.where(odd, -sin_pos, 0.0)   # feeds roll by -1: -x[j+1]*sin at even j
    sin_right = jnp.where(odd, 0.0, sin_pos)   # feeds roll by +1: +x[j-1]*sin at odd j
    tile = lambda t: jnp.tile(t, (1, n_heads)).astype(jnp.float32)
    return tile(cos_pos), tile(sin_left), tile(sin_right)


def pair_swap_neg(x):
    """[-x1, x0, -x3, x2, ...] along the last axis (reference only)."""
    x_even = x[..., 0::2]
    x_odd = x[..., 1::2]
    return jnp.stack([-x_odd, x_even], axis=-1).reshape(x.shape)


def init_params(key, d_model, n_heads, d_k, d_v):
    ks = jax.random.split(key, 8)
    s = 0.05
    return {
        "wq": s * jax.random.normal(ks[0], (d_model, n_heads * d_k), jnp.float32),
        "bq": s * jax.random.normal(ks[1], (n_heads * d_k,), jnp.float32),
        "wk": s * jax.random.normal(ks[2], (d_model, n_heads * d_k), jnp.float32),
        "bk": s * jax.random.normal(ks[3], (n_heads * d_k,), jnp.float32),
        "wv": s * jax.random.normal(ks[4], (d_model, n_heads * d_v), jnp.float32),
        "bv": s * jax.random.normal(ks[5], (n_heads * d_v,), jnp.float32),
        "wo": s * jax.random.normal(ks[6], (n_heads * d_v, d_model), jnp.float32),
        "bo": s * jax.random.normal(ks[7], (d_model,), jnp.float32),
    }


def prepare_kernel_params(params, d_model, n_heads):
    """One-time (init-time) prep: fuse W_Q|W_K|W_V, fold 1/sqrt(head_dim) into
    the Q projection (RoPE is linear, so rope(s*q) = s*rope(q)), and pre-cast
    matmul weights to bf16 (biases stay f32)."""
    scale = float(d_model // n_heads) ** -0.5          # lsa=False -> constant
    wqkv = jnp.concatenate([params["wq"] * scale, params["wk"], params["wv"]],
                           axis=1)
    bqkv = jnp.concatenate([params["bq"] * scale, params["bk"], params["bv"]])
    return {
        "wqkv": wqkv.astype(jnp.bfloat16),
        "bqkv": bqkv.astype(jnp.float32),
        "wo": params["wo"].astype(jnp.bfloat16),
        "bo": params["bo"].astype(jnp.float32),
    }


def multihead_attention(Q, kparams, tables, n_heads, d_k, d_v, d_model,
                        need_weights=True):
    """Forward pass of MultiheadAttention (K = V = Q, no masks, dropout = 0)."""
    bs, L, _ = Q.shape
    Hdk, Hdv = n_heads * d_k, n_heads * d_v
    x2d = Q.reshape(bs * L, d_model)

    # Fused QKV projection (one tiled matmul), bf16 inter-kernel activation.
    qkv = pallas_linear(x2d, kparams["wqkv"], kparams["bqkv"],
                        out_dtype=jnp.bfloat16)          # (bs*L, 2*Hdk+Hdv)
    qkv3 = qkv.reshape(bs, L, 2 * Hdk + Hdv)             # pure metadata reshape

    cos_t, sl_t, sr_t = tables
    out_packed, attn_w = pallas_attention(qkv3, cos_t, sl_t, sr_t,
                                          n_heads, d_k, d_v, need_weights)

    # out_packed is already [bs, L, n_heads*d_v] (bf16) -> feeds W_O directly.
    out = pallas_linear(out_packed.reshape(bs * L, Hdv), kparams["wo"],
                        kparams["bo"], out_dtype=jnp.float32)
    out = out.reshape(bs, L, d_model)
    # proj_dropout = attn_dropout = 0.0 -> identity
    return out, attn_w


# ------------------------- pure-JAX reference check ------------------------

def reference(Q, params, n_heads, d_k, d_v, d_model):
    bs, L, _ = Q.shape
    q = (Q @ params["wq"] + params["bq"]).reshape(bs, L, n_heads, d_k).transpose(0, 2, 1, 3)
    k = (Q @ params["wk"] + params["bk"]).reshape(bs, L, n_heads, d_k).transpose(0, 2, 1, 3)
    v = (Q @ params["wv"] + params["bv"]).reshape(bs, L, n_heads, d_v).transpose(0, 2, 1, 3)
    cos_pos, sin_pos = rope_cos_sin(L, d_k)
    qr = q * cos_pos + pair_swap_neg(q) * sin_pos
    kr = k * cos_pos + pair_swap_neg(k) * sin_pos
    scale = float(d_model // n_heads) ** -0.5
    scores = jnp.einsum("bhqd,bhkd->bhqk", qr, kr) * scale
    w = jax.nn.softmax(scores, axis=-1)
    out = jnp.einsum("bhqk,bhkd->bhqd", w, v)
    out = out.transpose(0, 2, 1, 3).reshape(bs, L, n_heads * d_v)
    out = out @ params["wo"] + params["bo"]
    return out, w


# --------------------------------- main -------------------------------------

if __name__ == "__main__":
    bs, seq_len, d_model, n_heads = 2, 16, 64, 4
    d_k = d_model // n_heads
    d_v = d_model // n_heads

    key = jax.random.PRNGKey(0)
    kx, kp = jax.random.split(key)
    Q = jax.random.normal(kx, (bs, seq_len, d_model), jnp.float32)
    params = init_params(kp, d_model, n_heads, d_k, d_v)
    kparams = prepare_kernel_params(params, d_model, n_heads)     # once, at init
    tables = rope_tables_packed(seq_len, d_k, n_heads)            # once, at init

    out, attn_w = multihead_attention(Q, kparams, tables, n_heads, d_k, d_v,
                                      d_model)
    out = jax.block_until_ready(out)
    attn_w = jax.block_until_ready(attn_w)

    # Fast path: skip the bs*H*L^2 attn_weights HBM writeback entirely.
    out_nw, w_none = multihead_attention(Q, kparams, tables, n_heads, d_k, d_v,
                                         d_model, need_weights=False)
    out_nw = jax.block_until_ready(out_nw)

    ref_out, ref_w = reference(Q, params, n_heads, d_k, d_v, d_model)
    assert out.shape == (bs, seq_len, d_model)
    assert attn_w.shape == (bs, n_heads, seq_len, seq_len)
    # bf16 weights/activations at MXU boundaries (f32 accumulation, f32 RoPE /
    # softmax) -> looser tolerance than a pure-f32 path; fine for inference.
    assert jnp.allclose(out, ref_out, atol=4e-2, rtol=4e-2)
    assert jnp.allclose(attn_w, ref_w, atol=2e-2, rtol=2e-2)
    assert w_none is None
    assert jnp.allclose(out_nw, out, atol=1e-6, rtol=1e-6)

    print("KERNEL_OK")
</pallas_src>

<mosaic_0001>
module attributes {stable_mosaic.version = 11 : i64} {
  func.func @_linear_kernel(%arg0: i32, %arg1: i32, %arg2: i32, %arg3: memref<32x64xf32, #tpu.memory_space<vmem>>, %arg4: memref<64x192xbf16, #tpu.memory_space<vmem>>, %arg5: memref<1x192xf32, #tpu.memory_space<vmem>>, %arg6: memref<32x192xbf16, #tpu.memory_space<vmem>>, %arg7: memref<32x192xf32, #tpu.memory_space<vmem>>) attributes {dimension_semantics = [#tpu.dimension_semantics<parallel>, #tpu.dimension_semantics<parallel>, #tpu.dimension_semantics<arbitrary>], iteration_bounds = array<i64: 1, 1, 1>, scalar_prefetch = 0 : i64, scratch_operands = 1 : i64, tpu.core_type = #tpu.core_type<tc>, window_params = [{transform_indices = @transform_0, window_bounds = array<i64: 32, 64>}, {transform_indices = @transform_1, window_bounds = array<i64: 64, 192>}, {transform_indices = @transform_2, window_bounds = array<i64: 1, 192>}, {transform_indices = @transform_3, window_bounds = array<i64: 32, 192>}]} {
    %c0_i32 = arith.constant 0 : i32
    %0 = arith.cmpi eq, %arg2, %c0_i32 : i32
    %1 = arith.extui %0 : i1 to i32
    %c0_i32_0 = arith.constant 0 : i32
    %2 = arith.cmpi ne, %1, %c0_i32_0 : i32
    scf.if %2 {
      %cst_10 = arith.constant 0.000000e+00 : f32
      %13 = vector.broadcast %cst_10 : f32 to vector<32x192xf32>
      %c0_11 = arith.constant 0 : index
      %c0_12 = arith.constant 0 : index
      %14 = vector.load %arg7[%c0_11, %c0_12] : memref<32x192xf32, #tpu.memory_space<vmem>>, vector<32x192xf32>
      tpu.vector_store %arg7[%c0_11, %c0_12], %13 {strides = array<i32>} : memref<32x192xf32, #tpu.memory_space<vmem>>, vector<32x192xf32>,
    } else {
    }
    %c0 = arith.constant 0 : index
    %c0_1 = arith.constant 0 : index
    %3 = vector.load %arg7[%c0, %c0_1] : memref<32x192xf32, #tpu.memory_space<vmem>>, vector<32x192xf32>
    %c0_2 = arith.constant 0 : index
    %c0_3 = arith.constant 0 : index
    %4 = vector.load %arg3[%c0_2, %c0_3] : memref<32x64xf32, #tpu.memory_space<vmem>>, vector<32x64xf32>
    %5 = arith.truncf %4 : vector<32x64xf32> to vector<32x64xbf16>
    %c0_4 = arith.constant 0 : index
    %c0_5 = arith.constant 0 : index
    %6 = vector.load %arg4[%c0_4, %c0_5] : memref<64x192xbf16, #tpu.memory_space<vmem>>, vector<64x192xbf16>
    %cst = arith.constant dense<0.000000e+00> : vector<32x192xf32>
    %7 = tpu.matmul %5, %6, %cst {dimension_numbers = #tpu.dot_dimension_numbers<[1], [0], [0], [1], [0, 0, 1, 1], [], []>} : vector<32x64xbf16>, vector<64x192xbf16>, vector<32x192xf32> -> vector<32x192xf32>
    %8 = arith.addf %3, %7 : vector<32x192xf32>
    %c0_6 = arith.constant 0 : index
    %c0_7 = arith.constant 0 : index
    %9 = vector.load %arg7[%c0_6, %c0_7] : memref<32x192xf32, #tpu.memory_space<vmem>>, vector<32x192xf32>
    tpu.vector_store %arg7[%c0_6, %c0_7], %8 {strides = array<i32>} : memref<32x192xf32, #tpu.memory_space<vmem>>, vector<32x192xf32>,
    %c0_i32_8 = arith.constant 0 : i32
    %10 = arith.cmpi eq, %arg2, %c0_i32_8 : i32
    %11 = arith.extui %10 : i1 to i32
    %c0_i32_9 = arith.constant 0 : i32
    %12 = arith.cmpi ne, %11, %c0_i32_9 : i32
    scf.if %12 {
      %c0_10 = arith.constant 0 : index
      %c0_11 = arith.constant 0 : index
      %13 = vector.load %arg7[%c0_10, %c0_11] : memref<32x192xf32, #tpu.memory_space<vmem>>, vector<32x192xf32>
      %c0_12 = arith.constant 0 : index
      %c0_13 = arith.constant 0 : index
      %14 = vector.load %arg5[%c0_12, %c0_13] : memref<1x192xf32, #tpu.memory_space<vmem>>, vector<1x192xf32>
      %15 = vector.broadcast %14 : vector<1x192xf32> to vector<32x192xf32>
      %16 = arith.addf %13, %15 : vector<32x192xf32>
      %17 = arith.truncf %16 : vector<32x192xf32> to vector<32x192xbf16>
      %c0_14 = arith.constant 0 : index
      %c0_15 = arith.constant 0 : index
      %18 = vector.load %arg6[%c0_14, %c0_15] : memref<32x192xbf16, #tpu.memory_space<vmem>>, vector<32x192xbf16>
      tpu.vector_store %arg6[%c0_14, %c0_15], %17 {strides = array<i32>} : memref<32x192xbf16, #tpu.memory_space<vmem>>, vector<32x192xbf16>,
    } else {
    }
    return
  }
  func.func @transform_0(%arg0: i32, %arg1: i32, %arg2: i32) -> (i32, i32) {
    %c0_i32 = arith.constant 0 : i32
    return %arg0, %arg2 : i32, i32
  }
  func.func @transform_1(%arg0: i32, %arg1: i32, %arg2: i32) -> (i32, i32) {
    %c0_i32 = arith.constant 0 : i32
    return %arg2, %arg1 : i32, i32
  }
  func.func @transform_2(%arg0: i32, %arg1: i32, %arg2: i32) -> (i32, i32) {
    %c0_i32 = arith.constant 0 : i32
    %c0_i32_0 = arith.constant 0 : i32
    return %c0_i32, %arg1 : i32, i32
  }
  func.func @transform_3(%arg0: i32, %arg1: i32, %arg2: i32) -> (i32, i32) {
    %c0_i32 = arith.constant 0 : i32
    return %arg0, %arg1 : i32, i32
  }
}

</mosaic_0001>

<llo_original>
// kernel: tpu_custom_call.1
$region0: #{tpu_custom_call.1}
  #allocation0 [shape = 'u32[]', space=smem, size = 0x4, offset = 0x4, fixed_abs, tag = 'smem constant byte address 0x4 - core index']
  #allocation1 [shape = 'u32[144,128]{1,0:T(1,128)}', space=vmem, size = 0x12000, scoped, tag = 'internal scratch']
  #allocation2 [shape = 'f32[32,192]{1,0:T(8,128)}', space=vmem, size = 0x8000, scoped, tag = 'scratch operand']
  %s0 = inlined_call_operand.hbm [shape: f32[32,64], index: 0, kind: input, shape index: {}]
  %s1 = inlined_call_operand.hbm [shape: bf16[64,192], index: 1, kind: input, shape index: {}]
  %s2 = inlined_call_operand.vmem [shape: f32[1,192], index: 2, kind: input, shape index: {}]
  %s3 = inlined_call_operand.hbm [shape: bf16[32,192], index: 3, kind: output, shape index: {}]
  %s4 = sld [smem:[#allocation0]]
  $region38: #{tpu_custom_call.1} parent=0
    _
  %s6 = ssub.s32 1, %s4
  %s7 = scalar_select 0, %s6, %s4
  $region1: #{tpu_custom_call.1} parent=0
    #allocation3 [shape = 'u8[16384]{0}', space=vmem, size = 0x4000, scoped, tag = 'input window, operand 0, single buffered']
    #allocation4 [shape = 's32[1]{0}', space=sflag, size = 0x4, scoped, tag = 'scoped memory for tpu_custom_call.1']
    #allocation5 [shape = 's32[1]{0}', space=sflag, size = 0x4, scoped, tag = 'scoped memory for tpu_custom_call.1']
    #allocation6 [shape = 'u8[32768]{0}', space=vmem, size = 0x8000, scoped, tag = 'input window, operand 1, single buffered']
    #allocation7 [shape = 's32[1]{0}', space=sflag, size = 0x4, scoped, tag = 'scoped memory for tpu_custom_call.1']
    #allocation8 [shape = 'u8[16384]{0}', space=vmem, size = 0x4000, scoped, tag = 'output window, operand 0, single buffered']
    %8 = vsyncpa [#allocation4], 0
    %9 = vsyncpa [#allocation7], 0
    %10 = vsyncpa [#allocation5], 0
    // Predicated region
    $region2: #{tpu_custom_call.1} parent=1 // pred_check
      _
    $region3: #{tpu_custom_call.1} parent=1 // pred_check_branch
      %12 = sbr.rel (0) target = $region5
    $region4: #{tpu_custom_call.1} parent=1 // pred_region
      %s14 = ssub.s32 512, 512
      %15 = vsyncadd [#allocation4], %s14
      %s16 = sshll.u32 [#allocation3], 4
      %s17 = int_to_ptr.vmem [resolvable:$true] %s16
      %22 = dma.hbm_to_vmem [thread:$0]  %s0, 512, %s17, [#allocation4], 128, 128, 8
    $region5: #{tpu_custom_call.1} parent=1 // pred_fallthru
      _
    // Predicated region
    $region6: #{tpu_custom_call.1} parent=1 // pred_check
      _
    $region7: #{tpu_custom_call.1} parent=1 // pred_check_branch
      %24 = sbr.rel (0) target = $region9
    $region8: #{tpu_custom_call.1} parent=1 // pred_region
      %s26 = ssub.s32 1024, 1024
      %27 = vsyncadd [#allocation7], %s26
      %s28 = sshll.u32 [#allocation6], 4
      %s29 = int_to_ptr.vmem [resolvable:$true] %s28
      %34 = dma.hbm_to_vmem [thread:$0]  %s1, 1024, %s29, [#allocation7], 128, 128, 8
    $region9: #{tpu_custom_call.1} parent=1 // pred_fallthru
      _
    // Predicated region
    $region10: #{tpu_custom_call.1} parent=1 // pred_check
      _
    $region11: #{tpu_custom_call.1} parent=1 // pred_check_branch
      %36 = sbr.rel (0) target = $region13
    $region12: #{tpu_custom_call.1} parent=1 // pred_region
      _
    $region13: #{tpu_custom_call.1} parent=1 // pred_fallthru
      _
    // Predicated region
    $region14: #{tpu_custom_call.1} parent=1 // pred_check
      _
    $region15: #{tpu_custom_call.1} parent=1 // pred_check_branch
      %38 = sbr.rel (0) target = $region17
    $region16: #{tpu_custom_call.1} parent=1 // pred_region
      %39 = dma.done [#allocation4], 512
    $region17: #{tpu_custom_call.1} parent=1 // pred_fallthru
      _
    // Predicated region
    $region18: #{tpu_custom_call.1} parent=1 // pred_check
      _
    $region19: #{tpu_custom_call.1} parent=1 // pred_check_branch
      %41 = sbr.rel (0) target = $region21
    $region20: #{tpu_custom_call.1} parent=1 // pred_region
      %42 = dma.done [#allocation7], 1024
    $region21: #{tpu_custom_call.1} parent=1 // pred_fallthru
      _
    %p44 = scmp.eq.s32.totalorder 0, 0
    // Predicated region
    $region22: #{tpu_custom_call.1} parent=1 // pred_check
      %p45 = pneg %p44
    $region23: #{tpu_custom_call.1} parent=1 // pred_check_branch
      %47 = sbr.rel (%p45) target = $region25
    $region24: #{tpu_custom_call.1} parent=1 // pred_region
      %48 = vst [vmem:[#allocation2] sm:$0xff] 0.0
      %vm49 = vcmask 523264
      %50 = vst.msk [vmem:[#allocation2 + $0x8] sm:$0xff] %vm49, 0.0
      %51 = vst [vmem:[#allocation2 + $0x10] sm:$0xff] 0.0
      %52 = vst.msk [vmem:[#allocation2 + $0x18] sm:$0xff] %vm49, 0.0
      %53 = vst [vmem:[#allocation2 + $0x20] sm:$0xff] 0.0
      %54 = vst.msk [vmem:[#allocation2 + $0x28] sm:$0xff] %vm49, 0.0
      %55 = vst [vmem:[#allocation2 + $0x30] sm:$0xff] 0.0
      %56 = vst.msk [vmem:[#allocation2 + $0x38] sm:$0xff] %vm49, 0.0
    $region25: #{tpu_custom_call.1} parent=1 // pred_fallthru
      _
    %v57 = vld [vmem:[#allocation2] sm:$0xff]
    %v58 = vld [vmem:[#allocation2 + $0x8] sm:$0xff]
    %v59 = vld [vmem:[#allocation2 + $0x10] sm:$0xff]
    %v60 = vld [vmem:[#allocation2 + $0x18] sm:$0xff]
    %v61 = vld [vmem:[#allocation2 + $0x20] sm:$0xff]
    %v62 = vld [vmem:[#allocation2 + $0x28] sm:$0xff]
    %v63 = vld [vmem:[#allocation2 + $0x30] sm:$0xff]
    %v64 = vld [vmem:[#allocation2 + $0x38] sm:$0xff]
    %v65 = vld [vmem:[#allocation3] sm:$0xff]
    %v66 = vld [vmem:[#allocation3 + $0x8] sm:$0xff]
    %v67 = vld [vmem:[#allocation3 + $0x10] sm:$0xff]
    %v68 = vld [vmem:[#allocation3 + $0x18] sm:$0xff]
    %v69 = vpack.c.bf16 %v66, %v65
    %v70 = vpack.c.bf16 %v68, %v67
    %v71 = vld [vmem:[#allocation6] sm:$0xff]
    %v72 = vld [vmem:[#allocation6 + $0x8] sm:$0xff]
    %v73 = vld [vmem:[#allocation6 + $0x10] sm:$0xff]
    %v74 = vld [vmem:[#allocation6 + $0x18] sm:$0xff]
    %v75 = vld [vmem:[#allocation6 + $0x20] sm:$0xff]
    %v76 = vld [vmem:[#allocation6 + $0x28] sm:$0xff]
    %v77 = vld [vmem:[#allocation6 + $0x30] sm:$0xff]
    %v78 = vld [vmem:[#allocation6 + $0x38] sm:$0xff]
    %v87 = vunpack.c.l.b16 %v71
    %v88 = vunpack.c.h.b16 %v71
    %v89 = vunpack.c.l.b16 %v72
    %v90 = vunpack.c.h.b16 %v72
    %v91 = vunpack.c.l.b16 %v73
    %v92 = vunpack.c.h.b16 %v73
    %v93 = vunpack.c.l.b16 %v74
    %v94 = vunpack.c.h.b16 %v74
    %v95 = vunpack.c.l.b16 %v75
    %v96 = vunpack.c.h.b16 %v75
    %v97 = vunpack.c.l.b16 %v76
    %v98 = vunpack.c.h.b16 %v76
    %v99 = vunpack.c.l.b16 %v77
    %v100 = vunpack.c.h.b16 %v77
    %v101 = vunpack.c.l.b16 %v78
    %v102 = vunpack.c.h.b16 %v78
    %v103 = vpack.c.b16 %v89, %v87
    %v104 = vpack.c.b16 %v90, %v88
    %v105 = vpack.c.b16 %v93, %v91
    %v106 = vpack.c.b16 %v94, %v92
    %v107 = vpack.c.b16 %v97, %v95
    %v108 = vpack.c.b16 %v98, %v96
    %v109 = vpack.c.b16 %v101, %v99
    %v110 = vpack.c.b16 %v102, %v100
    %vm119 = vcmask 523264
    %v121 = vsel %vm119, %v69, 0
    %v124 = vsel %vm119, %v70, 0
    %126 = vmatprep.subr.bf16.mxu0 %v104
    %127 = vmatpush1.bf16.msra.mxu0 %v103
    %128 = vmatprep.subr.bf16.mxu0 %v106
    %129 = vmatpush1.bf16.msra.mxu0 %v105
    %130 = vmatprep.subr.bf16.mxu0 %v108
    %131 = vmatpush1.bf16.msra.mxu0 %v107
    %132 = vmatprep.subr.bf16.mxu0 %v110
    %133 = vmatpush1.bf16.msra.mxu0 %v109
    %134 = vmatprep.subr.bf16.mxu0 0
    %135 = vmatpush1.bf16.msra.mxu0 0
    %136 = vmatprep.subr.bf16.mxu0 0
    %137 = vmatpush1.bf16.msra.mxu0 0
    %138 = vmatprep.subr.bf16.mxu0 0
    %139 = vmatpush1.bf16.msra.mxu0 0
    %140 = vmatprep.subr.bf16.mxu0 0
    %141 = vmatpush1.bf16.msra.mxu0 0
    %142 = vmatprep.subr.bf16.mxu0 0
    %143 = vmatpush1.bf16.msra.mxu0 0
    %144 = vmatprep.subr.bf16.mxu0 0
    %145 = vmatpush1.bf16.msra.mxu0 0
    %146 = vmatprep.subr.bf16.mxu0 0
    %147 = vmatpush1.bf16.msra.mxu0 0
    %148 = vmatprep.subr.bf16.mxu0 0
    %149 = vmatpush1.bf16.msra.mxu0 0
    %150 = vmatprep.subr.bf16.mxu0 0
    %151 = vmatpush1.bf16.msra.mxu0 0
    %152 = vmatprep.subr.bf16.mxu0 0
    %153 = vmatpush1.bf16.msra.mxu0 0
    %154 = vmatprep.subr.bf16.mxu0 0
    %155 = vmatpush1.bf16.msra.mxu0 0
    %156 = vmatprep.subr.bf16.mxu0 0
    %157 = vmatpush1.bf16.msra.mxu0 0
    %158 = vmatprep.mubr.bf16.mxu0 0
    %159 = vmatmul.mubr.bf16.gmra.mrb[0].mxu0 %v121
    %v160 = vpop.f32.mrb[0].mxu0
    %v161 = vadd.f32 0.0, %v160
    %v162 = vpop.f32.mrb[0].mxu0
    %v163 = vadd.f32 0.0, %v162
    %v164 = vpop.f32.mrb[0].mxu0
    %v165 = vadd.f32 0.0, %v164
    %v166 = vpop.f32.mrb[0].mxu0
    %v167 = vadd.f32 0.0, %v166
    %168 = vmatprep.mubr.bf16.mxu0 0
    %169 = vmatmul.mubr.bf16.gmra.mrb[0].mxu0 %v124
    %v170 = vpop.f32.mrb[0].mxu0
    %v171 = vadd.f32 0.0, %v170
    %v172 = vpop.f32.mrb[0].mxu0
    %v173 = vadd.f32 0.0, %v172
    %v174 = vpop.f32.mrb[0].mxu0
    %v175 = vadd.f32 0.0, %v174
    %v176 = vpop.f32.mrb[0].mxu0
    %v177 = vadd.f32 0.0, %v176
    %178 = vdwg.mxu0
    %v179 = vadd.f32 %v57, %v161
    %v180 = vadd.f32 %v58, %v163
    %v181 = vadd.f32 %v59, %v165
    %v182 = vadd.f32 %v60, %v167
    %v183 = vadd.f32 %v61, %v171
    %v184 = vadd.f32 %v62, %v173
    %v185 = vadd.f32 %v63, %v175
    %v186 = vadd.f32 %v64, %v177
    %187 = vst [vmem:[#allocation2] sm:$0xff] %v179
    %188 = vst.msk [vmem:[#allocation2 + $0x8] sm:$0xff] %vm119, %v180
    %189 = vst [vmem:[#allocation2 + $0x10] sm:$0xff] %v181
    %190 = vst.msk [vmem:[#allocation2 + $0x18] sm:$0xff] %vm119, %v182
    %191 = vst [vmem:[#allocation2 + $0x20] sm:$0xff] %v183
    %192 = vst.msk [vmem:[#allocation2 + $0x28] sm:$0xff] %vm119, %v184
    %193 = vst [vmem:[#allocation2 + $0x30] sm:$0xff] %v185
    %194 = vst.msk [vmem:[#allocation2 + $0x38] sm:$0xff] %vm119, %v186
    // Predicated region
    $region26: #{tpu_custom_call.1} parent=1 // pred_check
      %p195 = pneg %p44
    $region27: #{tpu_custom_call.1} parent=1 // pred_check_branch
      %197 = sbr.rel (%p195) target = $region29
    $region28: #{tpu_custom_call.1} parent=1 // pred_region
      %v198 = vld [vmem:[#allocation2] sm:$0xff]
      %v199 = vld [vmem:[#allocation2 + $0x8] sm:$0xff]
      %v200 = vld [vmem:[#allocation2 + $0x10] sm:$0xff]
      %v201 = vld [vmem:[#allocation2 + $0x18] sm:$0xff]
      %v202 = vld [vmem:[#allocation2 + $0x20] sm:$0xff]
      %v203 = vld [vmem:[#allocation2 + $0x28] sm:$0xff]
      %v204 = vld [vmem:[#allocation2 + $0x30] sm:$0xff]
      %v205 = vld [vmem:[#allocation2 + $0x38] sm:$0xff]
      %v206 = vld [vmem:[%s2] sm:$0x3]
      %v208 = vlaneseq
      %v209 = vshrl.u32 %v208, 7
      %v210 = vsub.s32 0, %v209
      %v211 = vrot.slane %v206, %v210
      %v212 = vlaneseq
      %v213 = vshrl.u32 %v212, 7
      %v214 = vsub.s32 1, %v213
      %v215 = vrot.slane %v206, %v214
      %v218 = vadd.f32 %v198, %v211
      %v219 = vadd.f32 %v199, %v215
      %v220 = vadd.f32 %v200, %v211
      %v221 = vadd.f32 %v201, %v215
      %v222 = vadd.f32 %v202, %v211
      %v223 = vadd.f32 %v203, %v215
      %v224 = vadd.f32 %v204, %v211
      %v225 = vadd.f32 %v205, %v215
      %v226 = vpack.c.bf16 %v220, %v218
      %v227 = vpack.c.bf16 %v221, %v219
      %v228 = vpack.c.bf16 %v224, %v222
      %v229 = vpack.c.bf16 %v225, %v223
      %v234 = vunpack.c.l.b16 %v226
      %v235 = vunpack.c.l.b16 %v227
      %v236 = vunpack.c.h.b16 %v226
      %v237 = vunpack.c.h.b16 %v227
      %v238 = vunpack.c.l.b16 %v228
      %v239 = vunpack.c.l.b16 %v229
      %v240 = vunpack.c.h.b16 %v228
      %v241 = vunpack.c.h.b16 %v229
      %v242 = vpack.c.b16 %v235, %v234
      %v243 = vpack.c.b16 %v237, %v236
      %v244 = vpack.c.b16 %v239, %v238
      %v245 = vpack.c.b16 %v241, %v240
      %vm250 = vcmask 1043456
      %vm251 = vcmask 523268
      %vm252 = vmor %vm251, %vm250
      %253 = vst.msk [vmem:[#allocation8] sm:$0xff] %vm252, %v242
      %254 = vst.msk [vmem:[#allocation8 + $0x8] sm:$0xff] %vm252, %v243
      %255 = vst.msk [vmem:[#allocation8 + $0x10] sm:$0xff] %vm252, %v244
      %256 = vst.msk [vmem:[#allocation8 + $0x18] sm:$0xff] %vm252, %v245
    $region29: #{tpu_custom_call.1} parent=1 // pred_fallthru
      _
    // Predicated region
    $region30: #{tpu_custom_call.1} parent=1 // pred_check
      _
    $region31: #{tpu_custom_call.1} parent=1 // pred_check_branch
      %258 = sbr.rel (0) target = $region33
    $region32: #{tpu_custom_call.1} parent=1 // pred_region
      %s260 = ssub.s32 512, 512
      %261 = vsyncadd [#allocation5], %s260
      %s262 = sshll.u32 [#allocation8], 4
      %s263 = int_to_ptr.vmem [resolvable:$true] %s262
      %268 = dma.vmem_to_hbm [thread:$0]  %s263, 512, %s3, [#allocation5], 128, 128, 8
    $region33: #{tpu_custom_call.1} parent=1 // pred_fallthru
      _
    // Predicated region
    $region34: #{tpu_custom_call.1} parent=1 // pred_check
      _
    $region35: #{tpu_custom_call.1} parent=1 // pred_check_branch
      %270 = sbr.rel (0) target = $region37
    $region36: #{tpu_custom_call.1} parent=1 // pred_region
      %271 = dma.done [#allocation5], 512
    $region37: #{tpu_custom_call.1} parent=1 // pred_fallthru
      _
    %272 = vsyncpa [#allocation4], 1
    %273 = vsyncpa [#allocation7], 1
    %274 = vsyncpa [#allocation5], 1

</llo_original>
